<compile_context>
chip_gen: v7x
topology: tpu7x:2x2x1
jax: 0.10.0
libtpu: 0.0.40
codegen_flags: <defaults>
</compile_context>

<pallas_src>
import jax
import jax.numpy as jnp
from jax import lax
from jax.experimental import pallas as pl
from jax.experimental.pallas import tpu as pltpu

ALPHA = 0.3
BETA = 0.7
SMOOTH = 1.0
LANES = 128
MAX_TILE_LANES = 65536  # cap on spatial lanes per grid step (bounds in-kernel loop length)
CHAN_CHUNK = 32         # channel rows processed per register-partial block


def _round_up(v, m):
    return (v + m - 1) // m * m


def _pick_tile(BC, B, N, x_bytes, gt_bytes):
    """Spatial tile width (lanes) + vmem limit from a generation-aware VMEM budget."""
    try:
        vmem_cap = int(pltpu.get_tpu_info().vmem_capacity_bytes)
    except Exception:
        vmem_cap = 64 << 20  # conservative: v7x per-TensorCore physical VMEM
    budget = min(max(vmem_cap // 2, 16 << 20), 48 << 20)
    acc_bytes = 3 * _round_up(BC, 8) * LANES * 4
    per_lane = 2 * (BC * x_bytes + B * gt_bytes)  # double-buffered input bytes per lane
    avail = budget - acc_bytes - (2 << 20)
    tn = (avail // max(per_lane, 1)) // LANES * LANES
    tn = max(LANES, min(tn, MAX_TILE_LANES, _round_up(N, LANES)))
    need = 2 * tn * (BC * x_bytes + B * gt_bytes) + acc_bytes + (2 << 20)
    vmem_limit = int(min(vmem_cap, max(need, 32 << 20)))
    return tn, vmem_limit


def _make_kernel(B, C, N, TN, tiles_per_split, needs_mask):
    n_lane_tiles = TN // LANES
    unroll = n_lane_tiles if n_lane_tiles <= 8 else 8

    def kernel(x_ref, gt_ref, tp_ref, sx_ref, cnt_ref, tp_acc, sx_acc, cnt_acc):
        p = pl.program_id(0)
        t = pl.program_id(1)

        @pl.when(t == 0)
        def _init():
            tp_acc[...] = jnp.zeros_like(tp_acc)
            sx_acc[...] = jnp.zeros_like(sx_acc)
            cnt_acc[...] = jnp.zeros_like(cnt_acc)

        if needs_mask:
            # Logical (unclamped) spatial offset of this tile; lanes >= N are masked.
            base = (p * tiles_per_split + t) * TN

        for b in range(B):
            for c0 in range(0, C, CHAN_CHUNK):
                cb = min(CHAN_CHUNK, C - c0)
                row0 = b * C + c0
                chan = c0 + lax.broadcasted_iota(jnp.int32, (cb, LANES), 0)

                def body(j, carry, row0=row0, cb=cb, chan=chan, b=b):
                    tp_p, sx_p, cnt_p = carry
                    col = pl.multiple_of(j * LANES, LANES)
                    xs = x_ref[pl.ds(row0, cb), pl.ds(col, LANES)].astype(jnp.float32)
                    gt_b = gt_ref[pl.ds(b, 1), pl.ds(col, LANES)].astype(jnp.int32)
                    ys = jnp.broadcast_to(gt_b, (cb, LANES)) == chan
                    if needs_mask:
                        lane = base + col + lax.broadcasted_iota(jnp.int32, (cb, LANES), 1)
                        valid = lane < N
                        xs = jnp.where(valid, xs, 0.0)
                        ys = jnp.logical_and(ys, valid)
                    tp_p = tp_p + jnp.where(ys, xs, 0.0)
                    sx_p = sx_p + xs
                    cnt_p = cnt_p + ys.astype(jnp.float32)
                    return (tp_p, sx_p, cnt_p)

                zeros = jnp.zeros((cb, LANES), jnp.float32)
                tp_p, sx_p, cnt_p = lax.fori_loop(
                    0, n_lane_tiles, body, (zeros, zeros, zeros), unroll=unroll)

                rows = pl.ds(row0, cb)
                tp_acc[rows, :] += tp_p
                sx_acc[rows, :] += sx_p
                cnt_acc[rows, :] += cnt_p

        @pl.when(t == pl.num_programs(1) - 1)
        def _finalize():
            # Single cross-lane (XLU) reduce per quantity; tiny per-split partial output.
            tp_ref[0] = jnp.sum(tp_acc[...], axis=-1, keepdims=True)
            sx_ref[0] = jnp.sum(sx_acc[...], axis=-1, keepdims=True)
            cnt_ref[0] = jnp.sum(cnt_acc[...], axis=-1, keepdims=True)

    return kernel


def tversky_loss(x, y):
    """x: (B, C, H, W) net output; y: (B, H, W) or (B, 1, H, W) integer label map."""
    B, C, H, W = x.shape
    N = H * W
    BC = B * C

    # TODO(synk): one-hot gt input (shape == x.shape) and loss_mask are not supported;
    # only the label-map path of get_tp_fp_fn is implemented.
    yi = y.reshape(B, N)
    if not jnp.issubdtype(yi.dtype, jnp.integer):
        yi = yi.astype(jnp.int32)
    xf = x.reshape(BC, N)  # native dtype; cast to f32 happens in-kernel

    x_bytes = jnp.dtype(xf.dtype).itemsize
    gt_bytes = jnp.dtype(yi.dtype).itemsize
    TN, vmem_limit = _pick_tile(BC, B, N, x_bytes, gt_bytes)

    n_tiles = -(-N // TN)
    n_split = 2 if n_tiles >= 2 else 1          # dual-TensorCore split (v7x); serial elsewhere
    tiles_per_split = -(-n_tiles // n_split)
    needs_mask = (n_split * tiles_per_split * TN) != N

    if n_split * tiles_per_split == n_tiles:
        def in_map(p, t):
            return (0, p * tiles_per_split + t)
    else:
        last = n_tiles - 1

        def in_map(p, t):
            return (0, jnp.minimum(p * tiles_per_split + t, last))

    kernel = _make_kernel(B, C, N, TN, tiles_per_split, needs_mask)
    part_shape = jax.ShapeDtypeStruct((n_split, BC, 1), jnp.float32)
    out_map = lambda p, t: (p, 0, 0)

    tp_p, sx_p, cnt_p = pl.pallas_call(
        kernel,
        out_shape=(part_shape, part_shape, part_shape),
        grid=(n_split, tiles_per_split),
        in_specs=[
            pl.BlockSpec((BC, TN), in_map),
            pl.BlockSpec((B, TN), in_map),
        ],
        out_specs=(
            pl.BlockSpec((1, BC, 1), out_map),
            pl.BlockSpec((1, BC, 1), out_map),
            pl.BlockSpec((1, BC, 1), out_map),
        ),
        scratch_shapes=[
            pltpu.VMEM((BC, LANES), jnp.float32),  # tp accumulator
            pltpu.VMEM((BC, LANES), jnp.float32),  # sum_x accumulator
            pltpu.VMEM((BC, LANES), jnp.float32),  # onehot-count accumulator
        ],
        compiler_params=pltpu.CompilerParams(
            dimension_semantics=("parallel", "arbitrary"),
            vmem_limit_bytes=vmem_limit,
        ),
    )(xf, yi)

    # Tiny cross-split combine + Tversky math (few-element XLA ops).
    tp = jnp.sum(tp_p, axis=0)[:, 0]
    sx = jnp.sum(sx_p, axis=0)[:, 0]
    cnt = jnp.sum(cnt_p, axis=0)[:, 0]
    fp = sx - tp
    fn = cnt - tp
    tversky = (tp + SMOOTH) / (tp + ALPHA * fp + BETA * fn + SMOOTH)
    # do_bg=True, batch_dice=False -> mean over all (b, c).
    return -jnp.mean(tversky)


def _tversky_loss_ref(x, y):
    """Pure-JAX reference mirroring the PyTorch forward."""
    B, C, H, W = x.shape
    xf = x.astype(jnp.float32)
    y_onehot = jax.nn.one_hot(y, C, axis=1, dtype=jnp.float32)  # (B, C, H, W)
    axes = (2, 3)
    tp = jnp.sum(xf * y_onehot, axis=axes)
    fp = jnp.sum(xf * (1.0 - y_onehot), axis=axes)
    fn = jnp.sum((1.0 - xf) * y_onehot, axis=axes)
    tversky = (tp + SMOOTH) / (tp + ALPHA * fp + BETA * fn + SMOOTH)
    return -jnp.mean(tversky)


if __name__ == "__main__":
    key = jax.random.PRNGKey(0)
    kx, ky = jax.random.split(key)
    B, C, H, W = 2, 4, 16, 16
    # net output (apply_nonlin=None, so used as-is); [0,1) values like probabilities
    x = jax.random.uniform(kx, (B, C, H, W), dtype=jnp.float32)
    # integer label map (b, x, y)
    y = jax.random.randint(ky, (B, H, W), 0, C, dtype=jnp.int32)

    loss = jax.jit(tversky_loss)(x, y)
    loss = jax.block_until_ready(loss)

    ref = _tversky_loss_ref(x, y)
    assert jnp.allclose(loss, ref, atol=1e-5, rtol=1e-5), (loss, ref)
    print("KERNEL_OK")
</pallas_src>

<mosaic_0001>
module attributes {stable_mosaic.version = 11 : i64} {
  func.func @kernel(%arg0: i32, %arg1: i32, %arg2: memref<8x256xf32, #tpu.memory_space<vmem>>, %arg3: memref<2x256xi32, #tpu.memory_space<vmem>>, %arg4: memref<1x8x1xf32, #tpu.memory_space<vmem>>, %arg5: memref<1x8x1xf32, #tpu.memory_space<vmem>>, %arg6: memref<1x8x1xf32, #tpu.memory_space<vmem>>, %arg7: memref<8x128xf32, #tpu.memory_space<vmem>>, %arg8: memref<8x128xf32, #tpu.memory_space<vmem>>, %arg9: memref<8x128xf32, #tpu.memory_space<vmem>>) attributes {dimension_semantics = [#tpu.dimension_semantics<parallel>, #tpu.dimension_semantics<arbitrary>], iteration_bounds = array<i64: 1, 1>, scalar_prefetch = 0 : i64, scratch_operands = 3 : i64, tpu.core_type = #tpu.core_type<tc>, window_params = [{transform_indices = @transform_0, window_bounds = array<i64: 8, 256>}, {transform_indices = @transform_1, window_bounds = array<i64: 2, 256>}, {transform_indices = @transform_2, window_bounds = array<i64: 1, 8, 1>}, {transform_indices = @transform_3, window_bounds = array<i64: 1, 8, 1>}, {transform_indices = @transform_4, window_bounds = array<i64: 1, 8, 1>}]} {
    %c0_i32 = arith.constant 0 : i32
    %0 = arith.cmpi eq, %arg1, %c0_i32 : i32
    %1 = arith.extui %0 : i1 to i32
    %c0_i32_0 = arith.constant 0 : i32
    %2 = arith.cmpi ne, %1, %c0_i32_0 : i32
    scf.if %2 {
      %cst_46 = arith.constant 0.000000e+00 : f32
      %96 = vector.broadcast %cst_46 : f32 to vector<8x128xf32>
      %c0_47 = arith.constant 0 : index
      %c0_48 = arith.constant 0 : index
      %97 = vector.load %arg7[%c0_47, %c0_48] : memref<8x128xf32, #tpu.memory_space<vmem>>, vector<8x128xf32>
      tpu.vector_store %arg7[%c0_47, %c0_48], %96 {strides = array<i32>} : memref<8x128xf32, #tpu.memory_space<vmem>>, vector<8x128xf32>,
      %cst_49 = arith.constant 0.000000e+00 : f32
      %98 = vector.broadcast %cst_49 : f32 to vector<8x128xf32>
      %c0_50 = arith.constant 0 : index
      %c0_51 = arith.constant 0 : index
      %99 = vector.load %arg8[%c0_50, %c0_51] : memref<8x128xf32, #tpu.memory_space<vmem>>, vector<8x128xf32>
      tpu.vector_store %arg8[%c0_50, %c0_51], %98 {strides = array<i32>} : memref<8x128xf32, #tpu.memory_space<vmem>>, vector<8x128xf32>,
      %cst_52 = arith.constant 0.000000e+00 : f32
      %100 = vector.broadcast %cst_52 : f32 to vector<8x128xf32>
      %c0_53 = arith.constant 0 : index
      %c0_54 = arith.constant 0 : index
      %101 = vector.load %arg9[%c0_53, %c0_54] : memref<8x128xf32, #tpu.memory_space<vmem>>, vector<8x128xf32>
      tpu.vector_store %arg9[%c0_53, %c0_54], %100 {strides = array<i32>} : memref<8x128xf32, #tpu.memory_space<vmem>>, vector<8x128xf32>,
    } else {
    }
    %3 = tpu.iota {dimensions = array<i32: 0>} : vector<4x128xi32>
    %c0_i32_1 = arith.constant 0 : i32
    %4 = vector.broadcast %c0_i32_1 : i32 to vector<4x128xi32>
    %5 = arith.addi %4, %3 : vector<4x128xi32>
    %cst = arith.constant 0.000000e+00 : f32
    %6 = vector.broadcast %cst : f32 to vector<4x128xf32>
    %c0_i32_2 = arith.constant 0 : i32
    %c128_i32 = arith.constant 128 : i32
    %7 = arith.muli %c0_i32_2, %c128_i32 : i32
    %8 = tpu.assume_multiple %7, 128 : i32
    %c0 = arith.constant 0 : index
    %9 = arith.index_cast %8 : i32 to index
    %10 = vector.load %arg2[%c0, %9] : memref<8x256xf32, #tpu.memory_space<vmem>>, vector<4x128xf32>
    %c0_3 = arith.constant 0 : index
    %11 = arith.index_cast %8 : i32 to index
    %12 = vector.load %arg3[%c0_3, %11] : memref<2x256xi32, #tpu.memory_space<vmem>>, vector<1x128xi32>
    %13 = vector.shape_cast %12 : vector<1x128xi32> to vector<1x128xi32>
    %14 = vector.broadcast %13 : vector<1x128xi32> to vector<4x128xi32>
    %15 = arith.cmpi eq, %14, %5 : vector<4x128xi32>
    %cst_4 = arith.constant 0.000000e+00 : f32
    %16 = vector.broadcast %cst_4 : f32 to vector<4x128xf32>
    %17 = arith.select %15, %10, %16 : vector<4x128xi1>, vector<4x128xf32>
    %18 = arith.addf %6, %17 : vector<4x128xf32>
    %19 = arith.addf %6, %10 : vector<4x128xf32>
    %20 = arith.extui %15 : vector<4x128xi1> to vector<4x128xi32>
    %21 = arith.sitofp %20 : vector<4x128xi32> to vector<4x128xf32>
    %22 = arith.addf %6, %21 : vector<4x128xf32>
    %c1_i32 = arith.constant 1 : i32
    %c128_i32_5 = arith.constant 128 : i32
    %23 = arith.muli %c1_i32, %c128_i32_5 : i32
    %24 = tpu.assume_multiple %23, 128 : i32
    %c0_6 = arith.constant 0 : index
    %25 = arith.index_cast %24 : i32 to index
    %26 = vector.load %arg2[%c0_6, %25] : memref<8x256xf32, #tpu.memory_space<vmem>>, vector<4x128xf32>
    %c0_7 = arith.constant 0 : index
    %27 = arith.index_cast %24 : i32 to index
    %28 = vector.load %arg3[%c0_7, %27] : memref<2x256xi32, #tpu.memory_space<vmem>>, vector<1x128xi32>
    %29 = vector.shape_cast %28 : vector<1x128xi32> to vector<1x128xi32>
    %30 = vector.broadcast %29 : vector<1x128xi32> to vector<4x128xi32>
    %31 = arith.cmpi eq, %30, %5 : vector<4x128xi32>
    %cst_8 = arith.constant 0.000000e+00 : f32
    %32 = vector.broadcast %cst_8 : f32 to vector<4x128xf32>
    %33 = arith.select %31, %26, %32 : vector<4x128xi1>, vector<4x128xf32>
    %34 = arith.addf %18, %33 : vector<4x128xf32>
    %35 = arith.addf %19, %26 : vector<4x128xf32>
    %36 = arith.extui %31 : vector<4x128xi1> to vector<4x128xi32>
    %37 = arith.sitofp %36 : vector<4x128xi32> to vector<4x128xf32>
    %38 = arith.addf %22, %37 : vector<4x128xf32>
    %c2_i32 = arith.constant 2 : i32
    %c0_9 = arith.constant 0 : index
    %c0_10 = arith.constant 0 : index
    %39 = vector.load %arg7[%c0_9, %c0_10] : memref<8x128xf32, #tpu.memory_space<vmem>>, vector<4x128xf32>
    %40 = arith.addf %39, %34 : vector<4x128xf32>
    %c0_11 = arith.constant 0 : index
    %c0_12 = arith.constant 0 : index
    %41 = vector.load %arg7[%c0_11, %c0_12] : memref<8x128xf32, #tpu.memory_space<vmem>>, vector<4x128xf32>
    tpu.vector_store %arg7[%c0_11, %c0_12], %40 {strides = array<i32>} : memref<8x128xf32, #tpu.memory_space<vmem>>, vector<4x128xf32>,
    %c0_13 = arith.constant 0 : index
    %c0_14 = arith.constant 0 : index
    %42 = vector.load %arg8[%c0_13, %c0_14] : memref<8x128xf32, #tpu.memory_space<vmem>>, vector<4x128xf32>
    %43 = arith.addf %42, %35 : vector<4x128xf32>
    %c0_15 = arith.constant 0 : index
    %c0_16 = arith.constant 0 : index
    %44 = vector.load %arg8[%c0_15, %c0_16] : memref<8x128xf32, #tpu.memory_space<vmem>>, vector<4x128xf32>
    tpu.vector_store %arg8[%c0_15, %c0_16], %43 {strides = array<i32>} : memref<8x128xf32, #tpu.memory_space<vmem>>, vector<4x128xf32>,
    %c0_17 = arith.constant 0 : index
    %c0_18 = arith.constant 0 : index
    %45 = vector.load %arg9[%c0_17, %c0_18] : memref<8x128xf32, #tpu.memory_space<vmem>>, vector<4x128xf32>
    %46 = arith.addf %45, %38 : vector<4x128xf32>
    %c0_19 = arith.constant 0 : index
    %c0_20 = arith.constant 0 : index
    %47 = vector.load %arg9[%c0_19, %c0_20] : memref<8x128xf32, #tpu.memory_space<vmem>>, vector<4x128xf32>
    tpu.vector_store %arg9[%c0_19, %c0_20], %46 {strides = array<i32>} : memref<8x128xf32, #tpu.memory_space<vmem>>, vector<4x128xf32>,
    %48 = tpu.iota {dimensions = array<i32: 0>} : vector<4x128xi32>
    %c0_i32_21 = arith.constant 0 : i32
    %49 = vector.broadcast %c0_i32_21 : i32 to vector<4x128xi32>
    %50 = arith.addi %49, %48 : vector<4x128xi32>
    %cst_22 = arith.constant 0.000000e+00 : f32
    %51 = vector.broadcast %cst_22 : f32 to vector<4x128xf32>
    %c0_i32_23 = arith.constant 0 : i32
    %c128_i32_24 = arith.constant 128 : i32
    %52 = arith.muli %c0_i32_23, %c128_i32_24 : i32
    %53 = tpu.assume_multiple %52, 128 : i32
    %c4 = arith.constant 4 : index
    %54 = arith.index_cast %53 : i32 to index
    %55 = vector.load %arg2[%c4, %54] : memref<8x256xf32, #tpu.memory_space<vmem>>, vector<4x128xf32>
    %c1 = arith.constant 1 : index
    %56 = arith.index_cast %53 : i32 to index
    %57 = vector.load %arg3[%c1, %56] : memref<2x256xi32, #tpu.memory_space<vmem>>, vector<1x128xi32>
    %58 = vector.shape_cast %57 : vector<1x128xi32> to vector<1x128xi32>
    %59 = vector.broadcast %58 : vector<1x128xi32> to vector<4x128xi32>
    %60 = arith.cmpi eq, %59, %50 : vector<4x128xi32>
    %cst_25 = arith.constant 0.000000e+00 : f32
    %61 = vector.broadcast %cst_25 : f32 to vector<4x128xf32>
    %62 = arith.select %60, %55, %61 : vector<4x128xi1>, vector<4x128xf32>
    %63 = arith.addf %51, %62 : vector<4x128xf32>
    %64 = arith.addf %51, %55 : vector<4x128xf32>
    %65 = arith.extui %60 : vector<4x128xi1> to vector<4x128xi32>
    %66 = arith.sitofp %65 : vector<4x128xi32> to vector<4x128xf32>
    %67 = arith.addf %51, %66 : vector<4x128xf32>
    %c1_i32_26 = arith.constant 1 : i32
    %c128_i32_27 = arith.constant 128 : i32
    %68 = arith.muli %c1_i32_26, %c128_i32_27 : i32
    %69 = tpu.assume_multiple %68, 128 : i32
    %c4_28 = arith.constant 4 : index
    %70 = arith.index_cast %69 : i32 to index
    %71 = vector.load %arg2[%c4_28, %70] : memref<8x256xf32, #tpu.memory_space<vmem>>, vector<4x128xf32>
    %c1_29 = arith.constant 1 : index
    %72 = arith.index_cast %69 : i32 to index
    %73 = vector.load %arg3[%c1_29, %72] : memref<2x256xi32, #tpu.memory_space<vmem>>, vector<1x128xi32>
    %74 = vector.shape_cast %73 : vector<1x128xi32> to vector<1x128xi32>
    %75 = vector.broadcast %74 : vector<1x128xi32> to vector<4x128xi32>
    %76 = arith.cmpi eq, %75, %50 : vector<4x128xi32>
    %cst_30 = arith.constant 0.000000e+00 : f32
    %77 = vector.broadcast %cst_30 : f32 to vector<4x128xf32>
    %78 = arith.select %76, %71, %77 : vector<4x128xi1>, vector<4x128xf32>
    %79 = arith.addf %63, %78 : vector<4x128xf32>
    %80 = arith.addf %64, %71 : vector<4x128xf32>
    %81 = arith.extui %76 : vector<4x128xi1> to vector<4x128xi32>
    %82 = arith.sitofp %81 : vector<4x128xi32> to vector<4x128xf32>
    %83 = arith.addf %67, %82 : vector<4x128xf32>
    %c2_i32_31 = arith.constant 2 : i32
    %c4_32 = arith.constant 4 : index
    %c0_33 = arith.constant 0 : index
    %84 = vector.load %arg7[%c4_32, %c0_33] : memref<8x128xf32, #tpu.memory_space<vmem>>, vector<4x128xf32>
    %85 = arith.addf %84, %79 : vector<4x128xf32>
    %c4_34 = arith.constant 4 : index
    %c0_35 = arith.constant 0 : index
    %86 = vector.load %arg7[%c4_34, %c0_35] : memref<8x128xf32, #tpu.memory_space<vmem>>, vector<4x128xf32>
    tpu.vector_store %arg7[%c4_34, %c0_35], %85 {strides = array<i32>} : memref<8x128xf32, #tpu.memory_space<vmem>>, vector<4x128xf32>,
    %c4_36 = arith.constant 4 : index
    %c0_37 = arith.constant 0 : index
    %87 = vector.load %arg8[%c4_36, %c0_37] : memref<8x128xf32, #tpu.memory_space<vmem>>, vector<4x128xf32>
    %88 = arith.addf %87, %80 : vector<4x128xf32>
    %c4_38 = arith.constant 4 : index
    %c0_39 = arith.constant 0 : index
    %89 = vector.load %arg8[%c4_38, %c0_39] : memref<8x128xf32, #tpu.memory_space<vmem>>, vector<4x128xf32>
    tpu.vector_store %arg8[%c4_38, %c0_39], %88 {strides = array<i32>} : memref<8x128xf32, #tpu.memory_space<vmem>>, vector<4x128xf32>,
    %c4_40 = arith.constant 4 : index
    %c0_41 = arith.constant 0 : index
    %90 = vector.load %arg9[%c4_40, %c0_41] : memref<8x128xf32, #tpu.memory_space<vmem>>, vector<4x128xf32>
    %91 = arith.addf %90, %83 : vector<4x128xf32>
    %c4_42 = arith.constant 4 : index
    %c0_43 = arith.constant 0 : index
    %92 = vector.load %arg9[%c4_42, %c0_43] : memref<8x128xf32, #tpu.memory_space<vmem>>, vector<4x128xf32>
    tpu.vector_store %arg9[%c4_42, %c0_43], %91 {strides = array<i32>} : memref<8x128xf32, #tpu.memory_space<vmem>>, vector<4x128xf32>,
    %c0_i32_44 = arith.constant 0 : i32
    %93 = arith.cmpi eq, %arg1, %c0_i32_44 : i32
    %94 = arith.extui %93 : i1 to i32
    %c0_i32_45 = arith.constant 0 : i32
    %95 = arith.cmpi ne, %94, %c0_i32_45 : i32
    scf.if %95 {
      %c0_46 = arith.constant 0 : index
      %c0_47 = arith.constant 0 : index
      %96 = vector.load %arg7[%c0_46, %c0_47] : memref<8x128xf32, #tpu.memory_space<vmem>>, vector<8x128xf32>
      %cst_48 = arith.constant dense<0.000000e+00> : vector<8xf32>
      %97 = vector.multi_reduction <add>, %96, %cst_48 [1] : vector<8x128xf32> to vector<8xf32>
      %98 = vector.shape_cast %97 : vector<8xf32> to vector<8x1xf32>
      %c0_49 = arith.constant 0 : index
      %c0_50 = arith.constant 0 : index
      %c0_51 = arith.constant 0 : index
      %99 = vector.load %arg4[%c0_49, %c0_50, %c0_51] : memref<1x8x1xf32, #tpu.memory_space<vmem>>, vector<1x8x1xf32>
      %100 = vector.shape_cast %99 : vector<1x8x1xf32> to vector<8x1xf32>
      %101 = vector.shape_cast %98 : vector<8x1xf32> to vector<1x8x1xf32>
      tpu.vector_store %arg4[%c0_49, %c0_50, %c0_51], %101 {strides = array<i32>} : memref<1x8x1xf32, #tpu.memory_space<vmem>>, vector<1x8x1xf32>,
      %c0_52 = arith.constant 0 : index
      %c0_53 = arith.constant 0 : index
      %102 = vector.load %arg8[%c0_52, %c0_53] : memref<8x128xf32, #tpu.memory_space<vmem>>, vector<8x128xf32>
      %cst_54 = arith.constant dense<0.000000e+00> : vector<8xf32>
      %103 = vector.multi_reduction <add>, %102, %cst_54 [1] : vector<8x128xf32> to vector<8xf32>
      %104 = vector.shape_cast %103 : vector<8xf32> to vector<8x1xf32>
      %c0_55 = arith.constant 0 : index
      %c0_56 = arith.constant 0 : index
      %c0_57 = arith.constant 0 : index
      %105 = vector.load %arg5[%c0_55, %c0_56, %c0_57] : memref<1x8x1xf32, #tpu.memory_space<vmem>>, vector<1x8x1xf32>
      %106 = vector.shape_cast %105 : vector<1x8x1xf32> to vector<8x1xf32>
      %107 = vector.shape_cast %104 : vector<8x1xf32> to vector<1x8x1xf32>
      tpu.vector_store %arg5[%c0_55, %c0_56, %c0_57], %107 {strides = array<i32>} : memref<1x8x1xf32, #tpu.memory_space<vmem>>, vector<1x8x1xf32>,
      %c0_58 = arith.constant 0 : index
      %c0_59 = arith.constant 0 : index
      %108 = vector.load %arg9[%c0_58, %c0_59] : memref<8x128xf32, #tpu.memory_space<vmem>>, vector<8x128xf32>
      %cst_60 = arith.constant dense<0.000000e+00> : vector<8xf32>
      %109 = vector.multi_reduction <add>, %108, %cst_60 [1] : vector<8x128xf32> to vector<8xf32>
      %110 = vector.shape_cast %109 : vector<8xf32> to vector<8x1xf32>
      %c0_61 = arith.constant 0 : index
      %c0_62 = arith.constant 0 : index
      %c0_63 = arith.constant 0 : index
      %111 = vector.load %arg6[%c0_61, %c0_62, %c0_63] : memref<1x8x1xf32, #tpu.memory_space<vmem>>, vector<1x8x1xf32>
      %112 = vector.shape_cast %111 : vector<1x8x1xf32> to vector<8x1xf32>
      %113 = vector.shape_cast %110 : vector<8x1xf32> to vector<1x8x1xf32>
      tpu.vector_store %arg6[%c0_61, %c0_62, %c0_63], %113 {strides = array<i32>} : memref<1x8x1xf32, #tpu.memory_space<vmem>>, vector<1x8x1xf32>,
    } else {
    }
    return
  }
  func.func @transform_0(%arg0: i32, %arg1: i32) -> (i32, i32) {
    %c1_i32 = arith.constant 1 : i32
    %0 = arith.muli %arg0, %c1_i32 : i32
    %1 = arith.addi %0, %arg1 : i32
    %c0_i32 = arith.constant 0 : i32
    %c0_i32_0 = arith.constant 0 : i32
    return %c0_i32, %1 : i32, i32
  }
  func.func @transform_1(%arg0: i32, %arg1: i32) -> (i32, i32) {
    %c1_i32 = arith.constant 1 : i32
    %0 = arith.muli %arg0, %c1_i32 : i32
    %1 = arith.addi %0, %arg1 : i32
    %c0_i32 = arith.constant 0 : i32
    %c0_i32_0 = arith.constant 0 : i32
    return %c0_i32, %1 : i32, i32
  }
  func.func @transform_2(%arg0: i32, %arg1: i32) -> (i32, i32, i32) {
    %c0_i32 = arith.constant 0 : i32
    %c0_i32_0 = arith.constant 0 : i32
    %c0_i32_1 = arith.constant 0 : i32
    return %arg0, %c0_i32, %c0_i32_0 : i32, i32, i32
  }
  func.func @transform_3(%arg0: i32, %arg1: i32) -> (i32, i32, i32) {
    %c0_i32 = arith.constant 0 : i32
    %c0_i32_0 = arith.constant 0 : i32
    %c0_i32_1 = arith.constant 0 : i32
    return %arg0, %c0_i32, %c0_i32_0 : i32, i32, i32
  }
  func.func @transform_4(%arg0: i32, %arg1: i32) -> (i32, i32, i32) {
    %c0_i32 = arith.constant 0 : i32
    %c0_i32_0 = arith.constant 0 : i32
    %c0_i32_1 = arith.constant 0 : i32
    return %arg0, %c0_i32, %c0_i32_0 : i32, i32, i32
  }
}

</mosaic_0001>

<llo_original>
// kernel: tversky_loss.1
$region0: #{tversky_loss.1}
  #allocation0 [shape = 'u32[]', space=smem, size = 0x4, offset = 0x4, fixed_abs, tag = 'smem constant byte address 0x4 - core index']
  #allocation1 [shape = 'u32[144,128]{1,0:T(1,128)}', space=vmem, size = 0x12000, scoped, tag = 'internal scratch']
  #allocation2 [shape = 'f32[8,128]{1,0:T(8,128)}', space=vmem, size = 0x1000, scoped, tag = 'scratch operand']
  #allocation3 [shape = 'f32[8,128]{1,0:T(8,128)}', space=vmem, size = 0x1000, scoped, tag = 'scratch operand']
  #allocation4 [shape = 'f32[8,128]{1,0:T(8,128)}', space=vmem, size = 0x1000, scoped, tag = 'scratch operand']
  %s0 = inlined_call_operand.vmem [shape: f32[8,256], index: 0, kind: input, shape index: {}]
  %s1 = inlined_call_operand.vmem [shape: s32[2,256], index: 1, kind: input, shape index: {}]
  %s2 = inlined_call_operand.vmem [shape: f32[1,8,1], index: 2, kind: output, shape index: {0}]
  %s3 = inlined_call_operand.vmem [shape: f32[1,8,1], index: 3, kind: output, shape index: {1}]
  %s4 = inlined_call_operand.vmem [shape: f32[1,8,1], index: 4, kind: output, shape index: {2}]
  %5 = xla_tuple %s2, %s3, %s4
  %s6 = sld [smem:[#allocation0]]
  $region42: #{tversky_loss.1} parent=0
    _
  %s8 = ssub.s32 1, %s6
  %s9 = scalar_select 0, %s8, %s6
  // Predicated region
  $region2: #{tversky_loss.1} parent=0 // pred_check
    _
  $region3: #{tversky_loss.1} parent=0 // pred_check_branch
    %11 = sbr.rel (0) target = $region5
  $region4: #{tversky_loss.1} parent=0 // pred_region
    %s12 = sadd.s32 0, 0
    %s13 = smul.u32 2, %s12
    %p14 = scmp.lt.s32.totalorder %s13, 1
    %s15 = scalar_select %p14, %s13, 1
    %s16 = smul.addr %s15, 8
    %s17 = scalar_lea.vmem %s0, %s16
    %s18 = sadd.s32 0, 0
    %s19 = smul.u32 2, %s18
  $region5: #{tversky_loss.1} parent=0 // pred_fallthru
    _
  // Predicated region
  $region6: #{tversky_loss.1} parent=0 // pred_check
    _
  $region7: #{tversky_loss.1} parent=0 // pred_check_branch
    %21 = sbr.rel (0) target = $region9
  $region8: #{tversky_loss.1} parent=0 // pred_region
    %s22 = sadd.s32 0, 0
    %s23 = smul.u32 2, %s22
    %p24 = scmp.lt.s32.totalorder %s23, 1
    %s25 = scalar_select %p24, %s23, 1
    %s26 = smul.addr %s25, 2
    %s27 = scalar_lea.vmem %s1, %s26
    %s28 = sadd.s32 0, 0
    %s29 = smul.u32 2, %s28
  $region9: #{tversky_loss.1} parent=0 // pred_fallthru
    _
  %s30 = sadd.s32 0, 0
  %s31 = smul.u32 2, %s30
  %p32 = scmp.lt.s32.totalorder %s31, 1
  %s33 = scalar_select %p32, %s31, 1
  %s34 = smul.addr %s33, 8
  %s35 = scalar_lea.vmem %s0, %s34
  %s36 = sadd.s32 0, 0
  %s37 = smul.u32 2, %s36
  %p38 = scmp.lt.s32.totalorder %s37, 1
  %s39 = scalar_select %p38, %s37, 1
  %s40 = smul.addr %s39, 2
  %s41 = scalar_lea.vmem %s1, %s40
  %s42 = sadd.s32 0, 0
  %s43 = smul.u32 2, %s42
  %p44 = scmp.lt.s32.totalorder %s43, 1
  %s45 = scalar_select %p44, %s43, 1
  %s46 = smul.addr %s45, 8
  %s47 = scalar_lea.vmem %s0, %s46
  %s48 = sadd.s32 0, 0
  %s49 = smul.u32 2, %s48
  %s50 = sadd.s32 0, 0
  %s51 = smul.u32 2, %s50
  %p52 = scmp.lt.s32.totalorder %s51, 1
  %s53 = scalar_select %p52, %s51, 1
  %s54 = smul.addr %s53, 2
  %s55 = scalar_lea.vmem %s1, %s54
  %s56 = sadd.s32 0, 0
  %s57 = smul.u32 2, %s56
  %p58 = scmp.eq.s32.totalorder 0, 0
  // Predicated region
  $region10: #{tversky_loss.1} parent=0 // pred_check
    %p59 = pneg %p58
  $region11: #{tversky_loss.1} parent=0 // pred_check_branch
    %61 = sbr.rel (%p59) target = $region13
  $region12: #{tversky_loss.1} parent=0 // pred_region
    %62 = vst [vmem:[#allocation2] sm:$0xff] 0.0
    %63 = vst [vmem:[#allocation3] sm:$0xff] 0.0
    %64 = vst [vmem:[#allocation4] sm:$0xff] 0.0
  $region13: #{tversky_loss.1} parent=0 // pred_fallthru
    _
  %v65 = vlaneseq
  %v66 = vshrl.u32 %v65, 7
  %v67 = vld [vmem:[%s47] sm:$0xf]
  %v68 = vld [vmem:[%s55] sm:$0x1]
  %v69 = vlaneseq
  %v70 = vshrl.u32 %v69, 7
  %v71 = vsub.s32 0, %v70
  %v72 = vrot.slane %v68, %v71
  %vm73 = vcmp.eq.s32.totalorder %v72, %v66
  %v74 = vsel %vm73, %v67, 0.0
  %v75 = vadd.f32 %v74, 0.0
  %v76 = vadd.f32 %v67, 0.0
  %v77 = vsel %vm73, 1, 0
  %v78 = vcvt.s32.f32 %v77
  %v79 = vadd.f32 %v78, 0.0
  %s80 = scalar_lea.vmem %s47, 8
  %v81 = vld [vmem:[%s80] sm:$0xf]
  %s82 = scalar_lea.vmem %s55, 2
  %v83 = vld [vmem:[%s82] sm:$0x1]
  %v84 = vlaneseq
  %v85 = vshrl.u32 %v84, 7
  %v86 = vsub.s32 0, %v85
  %v87 = vrot.slane %v83, %v86
  %vm88 = vcmp.eq.s32.totalorder %v87, %v66
  %v89 = vsel %vm88, %v81, 0.0
  %v90 = vadd.f32 %v75, %v89
  %v91 = vadd.f32 %v76, %v81
  %v92 = vsel %vm88, 1, 0
  %v93 = vcvt.s32.f32 %v92
  %v94 = vadd.f32 %v79, %v93
  %v95 = vld [vmem:[#allocation2] sm:$0xf]
  %v96 = vadd.f32 %v95, %v90
  %97 = vst [vmem:[#allocation2] sm:$0xf] %v96
  %v98 = vld [vmem:[#allocation3] sm:$0xf]
  %v99 = vadd.f32 %v98, %v91
  %100 = vst [vmem:[#allocation3] sm:$0xf] %v99
  %v101 = vld [vmem:[#allocation4] sm:$0xf]
  %v102 = vadd.f32 %v101, %v94
  %103 = vst [vmem:[#allocation4] sm:$0xf] %v102
  %v104 = vld [vmem:[%s47] sm:$0xf0]
  %v105 = vld [vmem:[%s55 + $0x1] sm:$0x1]
  %v106 = vlaneseq
  %v107 = vshrl.u32 %v106, 7
  %v108 = vsub.s32 0, %v107
  %v109 = vrot.slane %v105, %v108
  %vm110 = vcmp.eq.s32.totalorder %v109, %v66
  %v112 = vrot.slane %v104, 4
  %v114 = vsel %vm110, %v112, 0.0
  %v115 = vadd.f32 %v114, 0.0
  %v116 = vadd.f32 %v104, 0.0
  %v117 = vsel %vm110, 1, 0
  %v118 = vcvt.s32.f32 %v117
  %v119 = vadd.f32 %v118, 0.0
  %v120 = vld [vmem:[%s80] sm:$0xf0]
  %v121 = vld [vmem:[%s82 + $0x1] sm:$0x1]
  %v122 = vlaneseq
  %v123 = vshrl.u32 %v122, 7
  %v124 = vsub.s32 0, %v123
  %v125 = vrot.slane %v121, %v124
  %vm126 = vcmp.eq.s32.totalorder %v125, %v66
  %v128 = vrot.slane %v120, 4
  %v130 = vsel %vm126, %v128, 0.0
  %v131 = vadd.f32 %v115, %v130
  %v132 = vadd.f32 %v116, %v120
  %v133 = vsel %vm126, 1, 0
  %v134 = vcvt.s32.f32 %v133
  %v135 = vadd.f32 %v119, %v134
  %v136 = vld [vmem:[#allocation2 + $0x4] sm:$0xf]
  %v137 = vadd.f32 %v136, %v131
  %138 = vst [vmem:[#allocation2 + $0x4] sm:$0xf] %v137
  %v139 = vld [vmem:[#allocation3 + $0x4] sm:$0xf]
  %v141 = vrot.slane %v132, 4
  %v143 = vadd.f32 %v139, %v141
  %144 = vst [vmem:[#allocation3 + $0x4] sm:$0xf] %v143
  %v145 = vld [vmem:[#allocation4 + $0x4] sm:$0xf]
  %v146 = vadd.f32 %v145, %v135
  %147 = vst [vmem:[#allocation4 + $0x4] sm:$0xf] %v146
  // Predicated region
  $region14: #{tversky_loss.1} parent=0 // pred_check
    %p148 = pneg %p58
  $region15: #{tversky_loss.1} parent=0 // pred_check_branch
    %150 = sbr.rel (%p148) target = $region17
  $region16: #{tversky_loss.1} parent=0 // pred_region
    %v151 = vld [vmem:[#allocation2] sm:$0xff]
    %152 = vadd.xlane.f32.xlu0 %v151
    %v153 = vpop.xlane.xlu0 %152
    %vm154 = vcmask 7168
    %155 = vst.msk [vmem:[%s2] sm:$0xff] %vm154, %v153
    %v156 = vld [vmem:[#allocation3] sm:$0xff]
    %157 = vadd.xlane.f32.xlu0 %v156
    %v158 = vpop.xlane.xlu0 %157
    %159 = vst.msk [vmem:[%s3] sm:$0xff] %vm154, %v158
    %v160 = vld [vmem:[#allocation4] sm:$0xff]
    %161 = vadd.xlane.f32.xlu0 %v160
    %v162 = vpop.xlane.xlu0 %161
    %163 = vst.msk [vmem:[%s4] sm:$0xff] %vm154, %v162
  $region17: #{tversky_loss.1} parent=0 // pred_fallthru
    _
  // Predicated region
  $region18: #{tversky_loss.1} parent=0 // pred_check
    _
  $region19: #{tversky_loss.1} parent=0 // pred_check_branch
    %165 = sbr.rel (0) target = $region21
  $region20: #{tversky_loss.1} parent=0 // pred_region
    _
  $region21: #{tversky_loss.1} parent=0 // pred_fallthru
    _
  // Predicated region
  $region22: #{tversky_loss.1} parent=0 // pred_check
    _
  $region23: #{tversky_loss.1} parent=0 // pred_check_branch
    %167 = sbr.rel (0) target = $region25
  $region24: #{tversky_loss.1} parent=0 // pred_region
    _
  $region25: #{tversky_loss.1} parent=0 // pred_fallthru
    _
  // Predicated region
  $region26: #{tversky_loss.1} parent=0 // pred_check
    _
  $region27: #{tversky_loss.1} parent=0 // pred_check_branch
    %169 = sbr.rel (0) target = $region29
  $region28: #{tversky_loss.1} parent=0 // pred_region
    _
  $region29: #{tversky_loss.1} parent=0 // pred_fallthru
    _
  // Predicated region
  $region30: #{tversky_loss.1} parent=0 // pred_check
    _
  $region31: #{tversky_loss.1} parent=0 // pred_check_branch
    %171 = sbr.rel (0) target = $region33
  $region32: #{tversky_loss.1} parent=0 // pred_region
    _
  $region33: #{tversky_loss.1} parent=0 // pred_fallthru
    _
  // Predicated region
  $region34: #{tversky_loss.1} parent=0 // pred_check
    _
  $region35: #{tversky_loss.1} parent=0 // pred_check_branch
    %173 = sbr.rel (0) target = $region37
  $region36: #{tversky_loss.1} parent=0 // pred_region
    _
  $region37: #{tversky_loss.1} parent=0 // pred_fallthru
    _
  // Predicated region
  $region38: #{tversky_loss.1} parent=0 // pred_check
    _
  $region39: #{tversky_loss.1} parent=0 // pred_check_branch
    %175 = sbr.rel (0) target = $region41
  $region40: #{tversky_loss.1} parent=0 // pred_region
    _
  $region41: #{tversky_loss.1} parent=0 // pred_fallthru
    _

</llo_original>
